<compile_context>
chip_gen: v5e
topology: v5e:2x2
jax: 0.10.0
libtpu: 0.0.40
codegen_flags: <defaults>
</compile_context>

<pallas_src>
import functools

import jax
import jax.numpy as jnp
from jax import lax
from jax.experimental import pallas as pl
from jax.experimental.pallas import tpu as pltpu


LOG_STD_MIN = -20.0
LOG_STD_MAX = 2.0

_LANES = 128
_SUBLANES = 8


def _round_up(x, m):
    return (x + m - 1) // m * m


def _policy_kernel(num_actions, x_ref, w1_ref, whid_ref, bhid_ref,
                   whead_ref, bhead_ref, out_ref):
    def dense(h, w, b):
        # MXU matmul with f32 accumulation; bias add stays in f32 on the VPU.
        return jnp.dot(h.astype(w.dtype), w,
                       preferred_element_type=jnp.float32) + b

    # 4x (Linear + ReLU)
    h = jnp.maximum(dense(x_ref[...], w1_ref[...], bhid_ref[0:1, :]), 0.0)
    for k in range(whid_ref.shape[0]):            # 3 stacked hidden layers
        h = jnp.maximum(dense(h, whid_ref[k], bhid_ref[k + 1:k + 2, :]), 0.0)

    # Fused mean|log_std head: one matmul into a lane-dense 128-wide slab.
    head = dense(h, whead_ref[...], bhead_ref[...])

    # Clip only the log_std columns [num_actions, 2*num_actions).
    col = lax.broadcasted_iota(jnp.int32, head.shape, 1)
    is_log_std = (col >= num_actions) & (col < 2 * num_actions)
    head = jnp.where(is_log_std,
                     jnp.clip(head, LOG_STD_MIN, LOG_STD_MAX),
                     head)

    out_ref[...] = head.astype(out_ref.dtype)


@functools.partial(jax.jit, static_argnames=("compute_dtype",))
def policy_forward(state, params, compute_dtype=jnp.float32):
    """Forward pass of PolicyNetwork. Returns (mean, log_std)."""
    B, num_inputs = state.shape
    hidden = params["w1"].shape[1]
    num_actions = params["wm"].shape[1]

    out_pad = _round_up(max(2 * num_actions, _LANES), _LANES)

    # ---- pack parameters (13 operands -> 6) -------------------------------
    w1 = params["w1"].astype(compute_dtype)                        # (in, H)
    whid = jnp.stack(
        [params["w2"], params["w3"], params["w4"]], axis=0
    ).astype(compute_dtype)                                        # (3, H, H)
    bhid = jnp.concatenate(
        [params["b1"], params["b2"], params["b3"], params["b4"]], axis=0
    ).astype(jnp.float32)                                          # (4, H)

    whead = jnp.concatenate([params["wm"], params["ws"]], axis=1)  # (H, 2A)
    whead = jnp.pad(whead, ((0, 0), (0, out_pad - 2 * num_actions)))
    whead = whead.astype(compute_dtype)                            # (H, 128)
    bhead = jnp.concatenate([params["bm"], params["bs"]], axis=1)  # (1, 2A)
    bhead = jnp.pad(bhead, ((0, 0), (0, out_pad - 2 * num_actions)))
    bhead = bhead.astype(jnp.float32)                              # (1, 128)

    # ---- batch tiling ------------------------------------------------------
    if B <= 256:
        TB = _round_up(B, _SUBLANES)       # single grid step at toy sizes
    else:
        TB = 256                           # pipelined / megacore-sharded tiles
    B_pad = _round_up(B, TB)

    x = state.astype(compute_dtype)
    if B_pad != B:
        x = jnp.pad(x, ((0, B_pad - B), (0, 0)))

    grid = (B_pad // TB,)
    kernel = functools.partial(_policy_kernel, num_actions)

    out = pl.pallas_call(
        kernel,
        out_shape=jax.ShapeDtypeStruct((B_pad, out_pad), jnp.float32),
        grid=grid,
        in_specs=[
            pl.BlockSpec((TB, num_inputs), lambda i: (i, 0)),       # state tile
            pl.BlockSpec((num_inputs, hidden), lambda i: (0, 0)),   # w1 (resident)
            pl.BlockSpec((3, hidden, hidden), lambda i: (0, 0, 0)), # w2..w4
            pl.BlockSpec((4, hidden), lambda i: (0, 0)),            # b1..b4
            pl.BlockSpec((hidden, out_pad), lambda i: (0, 0)),      # fused head W
            pl.BlockSpec((1, out_pad), lambda i: (0, 0)),           # fused head b
        ],
        out_specs=pl.BlockSpec((TB, out_pad), lambda i: (i, 0)),
        compiler_params=pltpu.CompilerParams(
            dimension_semantics=("parallel",)),
    )(x, w1, whid, bhid, whead, bhead)

    mean = out[:B, :num_actions]
    log_std = out[:B, num_actions:2 * num_actions]
    return mean, log_std


def init_params(key, num_inputs, num_actions, hidden_size, init_w=0.003):
    """Deterministic init mirroring the PyTorch module's __init__ shapes.

    Weights are stored pre-transposed as (in, out); biases as (1, out).
    nn.Linear default init: U(-1/sqrt(fan_in), 1/sqrt(fan_in));
    mean/log_std heads: U(-init_w, init_w).
    """
    keys = jax.random.split(key, 12)

    def linear_default(kw, kb, fan_in, fan_out):
        bound = 1.0 / jnp.sqrt(fan_in)
        w = jax.random.uniform(kw, (fan_in, fan_out), jnp.float32, -bound, bound)
        b = jax.random.uniform(kb, (1, fan_out), jnp.float32, -bound, bound)
        return w, b

    def linear_small(kw, kb, fan_in, fan_out):
        w = jax.random.uniform(kw, (fan_in, fan_out), jnp.float32, -init_w, init_w)
        b = jax.random.uniform(kb, (1, fan_out), jnp.float32, -init_w, init_w)
        return w, b

    w1, b1 = linear_default(keys[0], keys[1], num_inputs, hidden_size)
    w2, b2 = linear_default(keys[2], keys[3], hidden_size, hidden_size)
    w3, b3 = linear_default(keys[4], keys[5], hidden_size, hidden_size)
    w4, b4 = linear_default(keys[6], keys[7], hidden_size, hidden_size)
    wm, bm = linear_small(keys[8], keys[9], hidden_size, num_actions)
    ws, bs = linear_small(keys[10], keys[11], hidden_size, num_actions)

    return dict(
        w1=w1, b1=b1, w2=w2, b2=b2, w3=w3, b3=b3, w4=w4, b4=b4,
        wm=wm, bm=bm, ws=ws, bs=bs,
    )


def _reference_forward(state, params):
    """Plain-JAX reference for correctness check."""
    h = jnp.maximum(state @ params["w1"] + params["b1"], 0.0)
    h = jnp.maximum(h @ params["w2"] + params["b2"], 0.0)
    h = jnp.maximum(h @ params["w3"] + params["b3"], 0.0)
    h = jnp.maximum(h @ params["w4"] + params["b4"], 0.0)
    mean = h @ params["wm"] + params["bm"]
    log_std = jnp.clip(h @ params["ws"] + params["bs"], LOG_STD_MIN, LOG_STD_MAX)
    return mean, log_std


if __name__ == "__main__":
    # Small shapes consistent with the module's forward:
    # state: (batch, num_inputs) -> (mean, log_std): (batch, num_actions)
    batch = 8
    num_inputs = 16
    hidden_size = 32
    num_actions = 4

    key = jax.random.PRNGKey(0)
    k_params, k_state = jax.random.split(key)

    params = init_params(k_params, num_inputs, num_actions, hidden_size)
    state = jax.random.normal(k_state, (batch, num_inputs), jnp.float32)

    mean, log_std = policy_forward(state, params)
    jax.block_until_ready((mean, log_std))

    ref_mean, ref_log_std = _reference_forward(state, params)
    assert mean.shape == (batch, num_actions)
    assert log_std.shape == (batch, num_actions)
    assert jnp.allclose(mean, ref_mean, atol=1e-5, rtol=1e-5)
    assert jnp.allclose(log_std, ref_log_std, atol=1e-5, rtol=1e-5)
    assert bool(jnp.all(log_std >= LOG_STD_MIN)) and bool(jnp.all(log_std <= LOG_STD_MAX))

    # Also exercise a ragged / tiled batch path (grid > 1) for shape safety.
    big_state = jax.random.normal(jax.random.PRNGKey(1), (300, num_inputs), jnp.float32)
    bm_, bl_ = policy_forward(big_state, params)
    jax.block_until_ready((bm_, bl_))
    rbm, rbl = _reference_forward(big_state, params)
    assert jnp.allclose(bm_, rbm, atol=1e-5, rtol=1e-5)
    assert jnp.allclose(bl_, rbl, atol=1e-5, rtol=1e-5)

    print("KERNEL_OK")
</pallas_src>

<mosaic_0001>
module attributes {stable_mosaic.version = 11 : i64} {
  func.func @_policy_kernel(%arg0: i32, %arg1: memref<8x16xf32, #tpu.memory_space<vmem>>, %arg2: memref<16x32xf32, #tpu.memory_space<vmem>>, %arg3: memref<3x32x32xf32, #tpu.memory_space<vmem>>, %arg4: memref<4x32xf32, #tpu.memory_space<vmem>>, %arg5: memref<32x128xf32, #tpu.memory_space<vmem>>, %arg6: memref<1x128xf32, #tpu.memory_space<vmem>>, %arg7: memref<8x128xf32, #tpu.memory_space<vmem>>) attributes {dimension_semantics = [#tpu.dimension_semantics<parallel>], iteration_bounds = array<i64: 1>, scalar_prefetch = 0 : i64, scratch_operands = 0 : i64, tpu.core_type = #tpu.core_type<tc>, window_params = [{transform_indices = @transform_0, window_bounds = array<i64: 8, 16>}, {pipeline_mode = #tpu.pipeline_mode<synchronous>, transform_indices = @transform_1, window_bounds = array<i64: 16, 32>}, {pipeline_mode = #tpu.pipeline_mode<synchronous>, transform_indices = @transform_2, window_bounds = array<i64: 3, 32, 32>}, {pipeline_mode = #tpu.pipeline_mode<synchronous>, transform_indices = @transform_3, window_bounds = array<i64: 4, 32>}, {pipeline_mode = #tpu.pipeline_mode<synchronous>, transform_indices = @transform_4, window_bounds = array<i64: 32, 128>}, {pipeline_mode = #tpu.pipeline_mode<synchronous>, transform_indices = @transform_5, window_bounds = array<i64: 1, 128>}, {transform_indices = @transform_6, window_bounds = array<i64: 8, 128>}]} {
    %c0 = arith.constant 0 : index
    %c0_0 = arith.constant 0 : index
    %0 = vector.load %arg1[%c0, %c0_0] : memref<8x16xf32, #tpu.memory_space<vmem>>, vector<8x16xf32>
    %c0_1 = arith.constant 0 : index
    %c0_2 = arith.constant 0 : index
    %1 = vector.load %arg2[%c0_1, %c0_2] : memref<16x32xf32, #tpu.memory_space<vmem>>, vector<16x32xf32>
    %c0_3 = arith.constant 0 : index
    %c0_4 = arith.constant 0 : index
    %2 = vector.load %arg4[%c0_3, %c0_4] : memref<4x32xf32, #tpu.memory_space<vmem>>, vector<1x32xf32>
    %cst = arith.constant dense<0.000000e+00> : vector<8x32xf32>
    %3 = tpu.matmul %0, %1, %cst {dimension_numbers = #tpu.dot_dimension_numbers<[1], [0], [0], [1], [0, 0, 1, 1], [], []>} : vector<8x16xf32>, vector<16x32xf32>, vector<8x32xf32> -> vector<8x32xf32>
    %4 = vector.broadcast %2 : vector<1x32xf32> to vector<8x32xf32>
    %5 = arith.addf %3, %4 : vector<8x32xf32>
    %cst_5 = arith.constant 0.000000e+00 : f32
    %6 = vector.broadcast %cst_5 : f32 to vector<8x32xf32>
    %7 = arith.maximumf %5, %6 : vector<8x32xf32>
    %c0_6 = arith.constant 0 : index
    %c0_7 = arith.constant 0 : index
    %c0_8 = arith.constant 0 : index
    %8 = vector.load %arg3[%c0_6, %c0_7, %c0_8] : memref<3x32x32xf32, #tpu.memory_space<vmem>>, vector<1x32x32xf32>
    %9 = vector.shape_cast %8 : vector<1x32x32xf32> to vector<32x32xf32>
    %c1 = arith.constant 1 : index
    %c0_9 = arith.constant 0 : index
    %10 = vector.load %arg4[%c1, %c0_9] : memref<4x32xf32, #tpu.memory_space<vmem>>, vector<1x32xf32>
    %cst_10 = arith.constant dense<0.000000e+00> : vector<8x32xf32>
    %11 = tpu.matmul %7, %9, %cst_10 {dimension_numbers = #tpu.dot_dimension_numbers<[1], [0], [0], [1], [0, 0, 1, 1], [], []>} : vector<8x32xf32>, vector<32x32xf32>, vector<8x32xf32> -> vector<8x32xf32>
    %12 = vector.broadcast %10 : vector<1x32xf32> to vector<8x32xf32>
    %13 = arith.addf %11, %12 : vector<8x32xf32>
    %cst_11 = arith.constant 0.000000e+00 : f32
    %14 = vector.broadcast %cst_11 : f32 to vector<8x32xf32>
    %15 = arith.maximumf %13, %14 : vector<8x32xf32>
    %c1_12 = arith.constant 1 : index
    %c0_13 = arith.constant 0 : index
    %c0_14 = arith.constant 0 : index
    %16 = vector.load %arg3[%c1_12, %c0_13, %c0_14] : memref<3x32x32xf32, #tpu.memory_space<vmem>>, vector<1x32x32xf32>
    %17 = vector.shape_cast %16 : vector<1x32x32xf32> to vector<32x32xf32>
    %c2 = arith.constant 2 : index
    %c0_15 = arith.constant 0 : index
    %18 = vector.load %arg4[%c2, %c0_15] : memref<4x32xf32, #tpu.memory_space<vmem>>, vector<1x32xf32>
    %cst_16 = arith.constant dense<0.000000e+00> : vector<8x32xf32>
    %19 = tpu.matmul %15, %17, %cst_16 {dimension_numbers = #tpu.dot_dimension_numbers<[1], [0], [0], [1], [0, 0, 1, 1], [], []>} : vector<8x32xf32>, vector<32x32xf32>, vector<8x32xf32> -> vector<8x32xf32>
    %20 = vector.broadcast %18 : vector<1x32xf32> to vector<8x32xf32>
    %21 = arith.addf %19, %20 : vector<8x32xf32>
    %cst_17 = arith.constant 0.000000e+00 : f32
    %22 = vector.broadcast %cst_17 : f32 to vector<8x32xf32>
    %23 = arith.maximumf %21, %22 : vector<8x32xf32>
    %c2_18 = arith.constant 2 : index
    %c0_19 = arith.constant 0 : index
    %c0_20 = arith.constant 0 : index
    %24 = vector.load %arg3[%c2_18, %c0_19, %c0_20] : memref<3x32x32xf32, #tpu.memory_space<vmem>>, vector<1x32x32xf32>
    %25 = vector.shape_cast %24 : vector<1x32x32xf32> to vector<32x32xf32>
    %c3 = arith.constant 3 : index
    %c0_21 = arith.constant 0 : index
    %26 = vector.load %arg4[%c3, %c0_21] : memref<4x32xf32, #tpu.memory_space<vmem>>, vector<1x32xf32>
    %cst_22 = arith.constant dense<0.000000e+00> : vector<8x32xf32>
    %27 = tpu.matmul %23, %25, %cst_22 {dimension_numbers = #tpu.dot_dimension_numbers<[1], [0], [0], [1], [0, 0, 1, 1], [], []>} : vector<8x32xf32>, vector<32x32xf32>, vector<8x32xf32> -> vector<8x32xf32>
    %28 = vector.broadcast %26 : vector<1x32xf32> to vector<8x32xf32>
    %29 = arith.addf %27, %28 : vector<8x32xf32>
    %cst_23 = arith.constant 0.000000e+00 : f32
    %30 = vector.broadcast %cst_23 : f32 to vector<8x32xf32>
    %31 = arith.maximumf %29, %30 : vector<8x32xf32>
    %c0_24 = arith.constant 0 : index
    %c0_25 = arith.constant 0 : index
    %32 = vector.load %arg5[%c0_24, %c0_25] : memref<32x128xf32, #tpu.memory_space<vmem>>, vector<32x128xf32>
    %c0_26 = arith.constant 0 : index
    %c0_27 = arith.constant 0 : index
    %33 = vector.load %arg6[%c0_26, %c0_27] : memref<1x128xf32, #tpu.memory_space<vmem>>, vector<1x128xf32>
    %cst_28 = arith.constant dense<0.000000e+00> : vector<8x128xf32>
    %34 = tpu.matmul %31, %32, %cst_28 {dimension_numbers = #tpu.dot_dimension_numbers<[1], [0], [0], [1], [0, 0, 1, 1], [], []>} : vector<8x32xf32>, vector<32x128xf32>, vector<8x128xf32> -> vector<8x128xf32>
    %35 = vector.broadcast %33 : vector<1x128xf32> to vector<8x128xf32>
    %36 = arith.addf %34, %35 : vector<8x128xf32>
    %37 = tpu.iota {dimensions = array<i32: 1>} : vector<8x128xi32>
    %c4_i32 = arith.constant 4 : i32
    %38 = vector.broadcast %c4_i32 : i32 to vector<8x128xi32>
    %39 = arith.cmpi sge, %37, %38 : vector<8x128xi32>
    %c8_i32 = arith.constant 8 : i32
    %40 = vector.broadcast %c8_i32 : i32 to vector<8x128xi32>
    %41 = arith.cmpi slt, %37, %40 : vector<8x128xi32>
    %42 = arith.andi %39, %41 : vector<8x128xi1>
    %cst_29 = arith.constant -2.000000e+01 : f32
    %cst_30 = arith.constant 2.000000e+00 : f32
    %43 = vector.broadcast %cst_29 : f32 to vector<8x128xf32>
    %44 = arith.maximumf %43, %36 : vector<8x128xf32>
    %45 = vector.broadcast %cst_30 : f32 to vector<8x128xf32>
    %46 = arith.minimumf %45, %44 : vector<8x128xf32>
    %47 = arith.select %42, %46, %36 : vector<8x128xi1>, vector<8x128xf32>
    %c0_31 = arith.constant 0 : index
    %c0_32 = arith.constant 0 : index
    %48 = vector.load %arg7[%c0_31, %c0_32] : memref<8x128xf32, #tpu.memory_space<vmem>>, vector<8x128xf32>
    tpu.vector_store %arg7[%c0_31, %c0_32], %47 {strides = array<i32>} : memref<8x128xf32, #tpu.memory_space<vmem>>, vector<8x128xf32>,
    return
  }
  func.func @transform_0(%arg0: i32) -> (i32, i32) {
    %c0_i32 = arith.constant 0 : i32
    %c0_i32_0 = arith.constant 0 : i32
    return %arg0, %c0_i32 : i32, i32
  }
  func.func @transform_1(%arg0: i32) -> (i32, i32) {
    %c0_i32 = arith.constant 0 : i32
    %c0_i32_0 = arith.constant 0 : i32
    %c0_i32_1 = arith.constant 0 : i32
    return %c0_i32, %c0_i32_0 : i32, i32
  }
  func.func @transform_2(%arg0: i32) -> (i32, i32, i32) {
    %c0_i32 = arith.constant 0 : i32
    %c0_i32_0 = arith.constant 0 : i32
    %c0_i32_1 = arith.constant 0 : i32
    %c0_i32_2 = arith.constant 0 : i32
    return %c0_i32, %c0_i32_0, %c0_i32_1 : i32, i32, i32
  }
  func.func @transform_3(%arg0: i32) -> (i32, i32) {
    %c0_i32 = arith.constant 0 : i32
    %c0_i32_0 = arith.constant 0 : i32
    %c0_i32_1 = arith.constant 0 : i32
    return %c0_i32, %c0_i32_0 : i32, i32
  }
  func.func @transform_4(%arg0: i32) -> (i32, i32) {
    %c0_i32 = arith.constant 0 : i32
    %c0_i32_0 = arith.constant 0 : i32
    %c0_i32_1 = arith.constant 0 : i32
    return %c0_i32, %c0_i32_0 : i32, i32
  }
  func.func @transform_5(%arg0: i32) -> (i32, i32) {
    %c0_i32 = arith.constant 0 : i32
    %c0_i32_0 = arith.constant 0 : i32
    %c0_i32_1 = arith.constant 0 : i32
    return %c0_i32, %c0_i32_0 : i32, i32
  }
  func.func @transform_6(%arg0: i32) -> (i32, i32) {
    %c0_i32 = arith.constant 0 : i32
    %c0_i32_0 = arith.constant 0 : i32
    return %arg0, %c0_i32 : i32, i32
  }
}

</mosaic_0001>

<llo_original>
// kernel: policy_forward.1
$region0: #{policy_forward.1}
  #allocation0 [shape = 'u32[]', space=smem, size = 0x4, offset = 0x4, fixed_abs, tag = 'smem constant byte address 0x4 - core index']
  #allocation1 [shape = 'u32[72,128]{1,0:T(1,128)}', space=vmem, size = 0x9000, scoped, tag = 'internal scratch']
  %s0 = inlined_call_operand.vmem [shape: f32[8,16], index: 0, kind: input, shape index: {}]
  %s1 = inlined_call_operand.vmem [shape: f32[16,32], index: 1, kind: input, shape index: {}]
  %s2 = inlined_call_operand.vmem [shape: f32[3,32,32], index: 2, kind: input, shape index: {}]
  %s3 = inlined_call_operand.vmem [shape: f32[4,32], index: 3, kind: input, shape index: {}]
  %s4 = inlined_call_operand.vmem [shape: f32[32,128], index: 4, kind: input, shape index: {}]
  %s5 = inlined_call_operand.vmem [shape: f32[1,128], index: 5, kind: input, shape index: {}]
  %s6 = inlined_call_operand.vmem [shape: f32[8,128], index: 6, kind: output, shape index: {}]
  %s7 = sld [smem:[#allocation0]]
  $region34: #{policy_forward.1} parent=0
    _
  %s9 = ssub.s32 1, %s7
  %s10 = scalar_select 0, %s9, %s7
  // Predicated region
  $region2: #{policy_forward.1} parent=0 // pred_check
    _
  $region3: #{policy_forward.1} parent=0 // pred_check_branch
    %12 = sbr.rel (0) target = $region5
  $region4: #{policy_forward.1} parent=0 // pred_region
    _
  $region5: #{policy_forward.1} parent=0 // pred_fallthru
    _
  // Predicated region
  $region6: #{policy_forward.1} parent=0 // pred_check
    _
  $region7: #{policy_forward.1} parent=0 // pred_check_branch
    %14 = sbr.rel (0) target = $region9
  $region8: #{policy_forward.1} parent=0 // pred_region
    _
  $region9: #{policy_forward.1} parent=0 // pred_fallthru
    _
  // Predicated region
  $region10: #{policy_forward.1} parent=0 // pred_check
    _
  $region11: #{policy_forward.1} parent=0 // pred_check_branch
    %16 = sbr.rel (0) target = $region13
  $region12: #{policy_forward.1} parent=0 // pred_region
    _
  $region13: #{policy_forward.1} parent=0 // pred_fallthru
    _
  // Predicated region
  $region14: #{policy_forward.1} parent=0 // pred_check
    _
  $region15: #{policy_forward.1} parent=0 // pred_check_branch
    %18 = sbr.rel (0) target = $region17
  $region16: #{policy_forward.1} parent=0 // pred_region
    _
  $region17: #{policy_forward.1} parent=0 // pred_fallthru
    _
  // Predicated region
  $region18: #{policy_forward.1} parent=0 // pred_check
    _
  $region19: #{policy_forward.1} parent=0 // pred_check_branch
    %20 = sbr.rel (0) target = $region21
  $region20: #{policy_forward.1} parent=0 // pred_region
    _
  $region21: #{policy_forward.1} parent=0 // pred_fallthru
    _
  // Predicated region
  $region22: #{policy_forward.1} parent=0 // pred_check
    _
  $region23: #{policy_forward.1} parent=0 // pred_check_branch
    %22 = sbr.rel (0) target = $region25
  $region24: #{policy_forward.1} parent=0 // pred_region
    _
  $region25: #{policy_forward.1} parent=0 // pred_fallthru
    _
  %v23 = vld [vmem:[%s0] sm:$0xff]
  %v24 = vld [vmem:[%s1] sm:$0xff]
  %v25 = vld [vmem:[%s1 + $0x8] sm:$0xff]
  %v26 = vld [vmem:[%s3] sm:$0x1]
  %v27 = vperm.slane %v26, 0
  %vm28 = vcmask 130048
  %v30 = vsel %vm28, %v23, 0
  %32 = vmatpush.msra.mxu0 0.0
  %33 = vmatpush.msra.mxu0 0.0
  %34 = vmatpush.msra.mxu0 0.0
  %35 = vmatpush.msra.mxu0 0.0
  %36 = vmatpush.msra.mxu0 0.0
  %37 = vmatpush.msra.mxu0 0.0
  %38 = vmatpush.msra.mxu0 0.0
  %39 = vmatpush.msra.mxu0 0.0
  %40 = vmatpush.msra.mxu0 0.0
  %41 = vmatpush.msra.mxu0 0.0
  %42 = vmatpush.msra.mxu0 0.0
  %43 = vmatpush.msra.mxu0 0.0
  %44 = vmatpush.msra.mxu0 0.0
  %45 = vmatpush.msra.mxu0 0.0
  %46 = vmatpush.msra.mxu0 %v25
  %47 = vmatpush.msra.mxu0 %v24
  %48 = vmatmul.f32.gmra.mxu0 %v30
  %v49 = vpop.f32.mrf.mxu0
  %v50 = vadd.f32 %v27, %v49
  %51 = vdwg.mxu0
  %v52 = vmax.f32 %v50, 0.0
  %v53 = vld [vmem:[%s2] sm:$0xff]
  %v54 = vld [vmem:[%s2 + $0x8] sm:$0xff]
  %v55 = vld [vmem:[%s2 + $0x10] sm:$0xff]
  %v56 = vld [vmem:[%s2 + $0x18] sm:$0xff]
  %v57 = vld [vmem:[%s3 + $0x1] sm:$0x1]
  %v58 = vperm.slane %v57, 0
  %vm59 = vcmask 261120
  %v61 = vsel %vm59, %v52, 0
  %63 = vmatpush.msra.mxu0 0.0
  %64 = vmatpush.msra.mxu0 0.0
  %65 = vmatpush.msra.mxu0 0.0
  %66 = vmatpush.msra.mxu0 0.0
  %67 = vmatpush.msra.mxu0 0.0
  %68 = vmatpush.msra.mxu0 0.0
  %69 = vmatpush.msra.mxu0 0.0
  %70 = vmatpush.msra.mxu0 0.0
  %71 = vmatpush.msra.mxu0 0.0
  %72 = vmatpush.msra.mxu0 0.0
  %73 = vmatpush.msra.mxu0 0.0
  %74 = vmatpush.msra.mxu0 0.0
  %75 = vmatpush.msra.mxu0 %v56
  %76 = vmatpush.msra.mxu0 %v55
  %77 = vmatpush.msra.mxu0 %v54
  %78 = vmatpush.msra.mxu0 %v53
  %79 = vmatmul.f32.gmra.mxu0 %v61
  %v80 = vpop.f32.mrf.mxu0
  %v81 = vadd.f32 %v58, %v80
  %82 = vdwg.mxu0
  %v83 = vmax.f32 %v81, 0.0
  %s84 = scalar_lea.vmem %s2, 32
  %v85 = vld [vmem:[%s84] sm:$0xff]
  %v86 = vld [vmem:[%s84 + $0x8] sm:$0xff]
  %v87 = vld [vmem:[%s84 + $0x10] sm:$0xff]
  %v88 = vld [vmem:[%s84 + $0x18] sm:$0xff]
  %v89 = vld [vmem:[%s3 + $0x2] sm:$0x1]
  %v90 = vperm.slane %v89, 0
  %v92 = vsel %vm59, %v83, 0
  %94 = vmatpush.msra.mxu0 0.0
  %95 = vmatpush.msra.mxu0 0.0
  %96 = vmatpush.msra.mxu0 0.0
  %97 = vmatpush.msra.mxu0 0.0
  %98 = vmatpush.msra.mxu0 0.0
  %99 = vmatpush.msra.mxu0 0.0
  %100 = vmatpush.msra.mxu0 0.0
  %101 = vmatpush.msra.mxu0 0.0
  %102 = vmatpush.msra.mxu0 0.0
  %103 = vmatpush.msra.mxu0 0.0
  %104 = vmatpush.msra.mxu0 0.0
  %105 = vmatpush.msra.mxu0 0.0
  %106 = vmatpush.msra.mxu0 %v88
  %107 = vmatpush.msra.mxu0 %v87
  %108 = vmatpush.msra.mxu0 %v86
  %109 = vmatpush.msra.mxu0 %v85
  %110 = vmatmul.f32.gmra.mxu0 %v92
  %v111 = vpop.f32.mrf.mxu0
  %v112 = vadd.f32 %v90, %v111
  %113 = vdwg.mxu0
  %v114 = vmax.f32 %v112, 0.0
  %s115 = scalar_lea.vmem %s2, 64
  %v116 = vld [vmem:[%s115] sm:$0xff]
  %v117 = vld [vmem:[%s115 + $0x8] sm:$0xff]
  %v118 = vld [vmem:[%s115 + $0x10] sm:$0xff]
  %v119 = vld [vmem:[%s115 + $0x18] sm:$0xff]
  %v120 = vld [vmem:[%s3 + $0x3] sm:$0x1]
  %v121 = vperm.slane %v120, 0
  %v123 = vsel %vm59, %v114, 0
  %125 = vmatpush.msra.mxu0 0.0
  %126 = vmatpush.msra.mxu0 0.0
  %127 = vmatpush.msra.mxu0 0.0
  %128 = vmatpush.msra.mxu0 0.0
  %129 = vmatpush.msra.mxu0 0.0
  %130 = vmatpush.msra.mxu0 0.0
  %131 = vmatpush.msra.mxu0 0.0
  %132 = vmatpush.msra.mxu0 0.0
  %133 = vmatpush.msra.mxu0 0.0
  %134 = vmatpush.msra.mxu0 0.0
  %135 = vmatpush.msra.mxu0 0.0
  %136 = vmatpush.msra.mxu0 0.0
  %137 = vmatpush.msra.mxu0 %v119
  %138 = vmatpush.msra.mxu0 %v118
  %139 = vmatpush.msra.mxu0 %v117
  %140 = vmatpush.msra.mxu0 %v116
  %141 = vmatmul.f32.gmra.mxu0 %v123
  %v142 = vpop.f32.mrf.mxu0
  %v143 = vadd.f32 %v121, %v142
  %144 = vdwg.mxu0
  %v145 = vmax.f32 %v143, 0.0
  %v146 = vld [vmem:[%s4] sm:$0xff]
  %v147 = vld [vmem:[%s4 + $0x8] sm:$0xff]
  %v148 = vld [vmem:[%s4 + $0x10] sm:$0xff]
  %v149 = vld [vmem:[%s4 + $0x18] sm:$0xff]
  %v150 = vld [vmem:[%s5] sm:$0x1]
  %v152 = vperm.slane %v150, 0
  %v155 = vsel %vm59, %v145, 0
  %157 = vmatpush.msra.mxu0 0.0
  %158 = vmatpush.msra.mxu0 0.0
  %159 = vmatpush.msra.mxu0 0.0
  %160 = vmatpush.msra.mxu0 0.0
  %161 = vmatpush.msra.mxu0 0.0
  %162 = vmatpush.msra.mxu0 0.0
  %163 = vmatpush.msra.mxu0 0.0
  %164 = vmatpush.msra.mxu0 0.0
  %165 = vmatpush.msra.mxu0 0.0
  %166 = vmatpush.msra.mxu0 0.0
  %167 = vmatpush.msra.mxu0 0.0
  %168 = vmatpush.msra.mxu0 0.0
  %169 = vmatpush.msra.mxu0 %v149
  %170 = vmatpush.msra.mxu0 %v148
  %171 = vmatpush.msra.mxu0 %v147
  %172 = vmatpush.msra.mxu0 %v146
  %173 = vmatmul.f32.gmra.mxu0 %v155
  %v174 = vpop.f32.mrf.mxu0
  %v175 = vadd.f32 %v152, %v174
  %176 = vdwg.mxu0
  %v177 = vlaneseq
  %v178 = vand.u32 %v177, 127
  %vm179 = vcmp.ge.s32.totalorder %v178, 4
  %vm180 = vcmp.lt.s32.totalorder %v178, 8
  %vm181 = vmand %vm179, %vm180
  %v182 = vmax.f32 %v175, -20.0
  %v183 = vmin.f32 %v182, 2.0
  %v184 = vsel %vm181, %v183, %v175
  %185 = vst [vmem:[%s6] sm:$0xff] %v184
  // Predicated region
  $region26: #{policy_forward.1} parent=0 // pred_check
    _
  $region27: #{policy_forward.1} parent=0 // pred_check_branch
    %187 = sbr.rel (0) target = $region29
  $region28: #{policy_forward.1} parent=0 // pred_region
    _
  $region29: #{policy_forward.1} parent=0 // pred_fallthru
    _
  // Predicated region
  $region30: #{policy_forward.1} parent=0 // pred_check
    _
  $region31: #{policy_forward.1} parent=0 // pred_check_branch
    %189 = sbr.rel (0) target = $region33
  $region32: #{policy_forward.1} parent=0 // pred_region
    _
  $region33: #{policy_forward.1} parent=0 // pred_fallthru
    _

</llo_original>
